<compile_context>
chip_gen: v5e
topology: v5e:2x2
jax: 0.10.0
libtpu: 0.0.40
codegen_flags: <defaults>
</compile_context>

<pallas_src>
import functools

import jax
import jax.numpy as jnp
from jax import lax
from jax.experimental import pallas as pl
from jax.experimental.pallas import tpu as pltpu


# ----------------------------- prologue: K / V projection -----------------------------

def _project_kv_kernel(x_ref, wk_ref, wv_ref, bv_ref, k_ref, v_ref):
    """One (batch, spatial-tile) step: K = Wk.x, V = Wv.x + bv, stored bf16.

    x_ref : (1, C, Tp) f32      wk_ref: (C8, C) bf16   wv_ref: (C, C) bf16
    bv_ref: (C, 1) f32          k_ref : (1, C8, Tp) bf16   v_ref: (1, C, Tp) bf16
    (bk is intentionally dropped: it cancels in the softmax.)
    """
    x = x_ref[0].astype(jnp.bfloat16)                                   # (C, Tp)
    k = jnp.dot(wk_ref[...], x, preferred_element_type=jnp.float32)     # (C8, Tp)
    v = jnp.dot(wv_ref[...], x,
                preferred_element_type=jnp.float32) + bv_ref[...]       # (C, Tp)
    k_ref[0] = k.astype(jnp.bfloat16)
    v_ref[0] = v.astype(jnp.bfloat16)


# ----------------------------- main: position attention -----------------------------

def dam_position_attention_kernel(x_q_ref, k_ref, v_ref, wq_ref, bq_ref, gamma_ref,
                                  o_ref, q_scr, m_scr, l_scr, acc_scr,
                                  *, valid_len, block_kv):
    """One (query-tile, batch, kv-tile) grid step with online softmax.

    x_q_ref : (1, C, Tq) f32   input tile for the query rows (resident across kv)
    k_ref   : (1, C8, Tkv) bf16   precomputed key tile
    v_ref   : (1, C, Tkv) bf16    precomputed value tile
    wq_ref  : (C8, C) bf16, bq_ref: (C8, 1) f32, gamma_ref: (1, 1) f32 in SMEM
    o_ref   : (1, C, Tq) f32   output tile (written at the last kv step)
    scratch : q (C8, Tq) bf16, m/l (1, Tq) f32, acc (C, Tq) f32
    """
    kv = pl.program_id(2)

    @pl.when(kv == 0)
    def _init():
        x_q = x_q_ref[0].astype(jnp.bfloat16)                           # (C, Tq)
        q = jnp.dot(wq_ref[...], x_q,
                    preferred_element_type=jnp.float32) + bq_ref[...]   # (C8, Tq) f32
        q_scr[...] = q.astype(jnp.bfloat16)
        m_scr[...] = jnp.full_like(m_scr, -jnp.inf)
        l_scr[...] = jnp.zeros_like(l_scr)
        acc_scr[...] = jnp.zeros_like(acc_scr)

    # scores s[j, i] = <k_j, q_i>; kv index on sublanes, query index on lanes.
    s = lax.dot_general(
        k_ref[0], q_scr[...],
        dimension_numbers=(((0,), (0,)), ((), ())),
        preferred_element_type=jnp.float32)                             # (Tkv, Tq)

    if valid_len is not None:
        # Spatial axis was padded to a multiple of 128: mask padded kv columns.
        col = kv * block_kv + lax.broadcasted_iota(jnp.int32, (block_kv, 1), 0)
        s = jnp.where(col < valid_len, s, -jnp.inf)

    # Online softmax over the kv axis (axis 0), per query column.
    m_prev = m_scr[...]                                                 # (1, Tq)
    m_new = jnp.maximum(m_prev, jnp.max(s, axis=0, keepdims=True))      # (1, Tq)
    alpha = jnp.exp(m_prev - m_new)                                     # (1, Tq)
    p = jnp.exp(s - m_new)                                              # (Tkv, Tq)

    l_scr[...] = alpha * l_scr[...] + jnp.sum(p, axis=0, keepdims=True)
    acc_scr[...] = alpha * acc_scr[...] + jnp.dot(
        v_ref[0], p.astype(jnp.bfloat16),
        preferred_element_type=jnp.float32)                             # (C, Tq)
    m_scr[...] = m_new

    @pl.when(kv == pl.num_programs(2) - 1)
    def _finalize():
        inv_l = pl.reciprocal(l_scr[...], approx=True)                  # (1, Tq)
        out = acc_scr[...] * inv_l                                      # (C, Tq)
        o_ref[0] = (gamma_ref[0, 0] * out + x_q_ref[0]).astype(o_ref.dtype)


# ----------------------------- wrapper helpers -----------------------------

def _pick_tile(L, candidates):
    for t in candidates:
        if L % t == 0:
            return t
    return L


def _pick_tile_q(L, N):
    # Large tq amortizes kv-stream HBM re-reads; prefer N*(L/tq) even so both
    # v7x TensorCores get work when the parallel axes are sharded.
    cands = (1024, 512, 256, 128)
    for t in cands:
        if L % t == 0 and (N * (L // t)) % 2 == 0:
            return t
    return _pick_tile(L, cands)


def _vmem_limit_bytes():
    # ~96 MiB on 128-MiB chips (v5e/v6e), ~48 MiB on 64-MiB/TC chips (v7x).
    try:
        cap = pltpu.get_tpu_info().vmem_capacity_bytes
    except Exception:
        cap = 64 * 1024 * 1024
    return min(96 * 1024 * 1024, int(cap * 3) // 4)


def _kv_stream_spec(shape, index_map, depth=3):
    # Deeper pipelining on the kv stream (the only input whose block index
    # changes every grid step).  Fall back to default double-buffering if the
    # installed jax's BlockSpec has no pipeline_mode kwarg.
    try:
        return pl.BlockSpec(shape, index_map, pipeline_mode=pl.Buffered(depth))
    except (TypeError, AttributeError):
        return pl.BlockSpec(shape, index_map)


# ----------------------------- forward -----------------------------

def dam_position_forward(x_nchw, params, *, block_q=None, block_kv=None):
    """x_nchw: (N, C, H, W) float32.  Returns (N, C, H, W) float32."""
    N, C, H, W = x_nchw.shape
    assert C % 8 == 0, "in_dim must be divisible by 8"
    C8 = C // 8
    L = H * W
    L_pad = ((L + 127) // 128) * 128           # pad spatial axis to a lane multiple

    # NCHW -> (N, C, L) is a pure reshape; padding only happens if L % 128 != 0.
    x_ncl = x_nchw.reshape(N, C, L)
    if L_pad != L:
        x_ncl = jnp.pad(x_ncl, ((0, 0), (0, 0), (0, L_pad - L)))

    tq = block_q or _pick_tile_q(L_pad, N)
    tkv = block_kv or _pick_tile(L_pad, (512, 256, 128))
    assert L_pad % tq == 0 and L_pad % tkv == 0, "block sizes must divide padded H*W"

    # Weights cast to bf16 once here (half the VMEM / DMA, native MXU path).
    wq = params["wq"].astype(jnp.bfloat16)          # (C8, C)
    wk = params["wk"].astype(jnp.bfloat16)          # (C8, C)
    wv = params["wv"].astype(jnp.bfloat16)          # (C, C)
    bq = params["bq"].reshape(C8, 1).astype(jnp.float32)
    bv = params["bv"].reshape(C, 1).astype(jnp.float32)
    # bk is dropped: it adds a per-query constant to every score -> cancels in softmax.
    gamma = params["gamma"].reshape(1, 1).astype(jnp.float32)

    vmem_limit = _vmem_limit_bytes()

    # ---- prologue: hoist K / V projections out of the attention hot loop ----
    tp = _pick_tile(L_pad, (2048, 1024, 512, 256, 128))
    k_ncl, v_ncl = pl.pallas_call(
        _project_kv_kernel,
        out_shape=(jax.ShapeDtypeStruct((N, C8, L_pad), jnp.bfloat16),
                   jax.ShapeDtypeStruct((N, C, L_pad), jnp.bfloat16)),
        grid_spec=pltpu.PrefetchScalarGridSpec(
            num_scalar_prefetch=0,
            grid=(N, L_pad // tp),
            in_specs=[
                pl.BlockSpec((1, C, tp), lambda b, i: (b, 0, i)),   # x tile
                pl.BlockSpec((C8, C), lambda b, i: (0, 0)),         # Wk (bf16)
                pl.BlockSpec((C, C), lambda b, i: (0, 0)),          # Wv (bf16)
                pl.BlockSpec((C, 1), lambda b, i: (0, 0)),          # bv
            ],
            out_specs=(pl.BlockSpec((1, C8, tp), lambda b, i: (b, 0, i)),
                       pl.BlockSpec((1, C, tp), lambda b, i: (b, 0, i))),
        ),
        compiler_params=pltpu.CompilerParams(
            dimension_semantics=("parallel", "parallel"),
            vmem_limit_bytes=vmem_limit),
    )(x_ncl, wk, wv, bv)

    # ---- flash-attention style position attention ----
    kernel = functools.partial(
        dam_position_attention_kernel,
        valid_len=(L if L_pad != L else None),
        block_kv=tkv)

    grid = (L_pad // tq, N, L_pad // tkv)       # larger parallel axis first

    out_ncl = pl.pallas_call(
        kernel,
        out_shape=jax.ShapeDtypeStruct((N, C, L_pad), jnp.float32),
        grid_spec=pltpu.PrefetchScalarGridSpec(
            num_scalar_prefetch=0,
            grid=grid,
            in_specs=[
                pl.BlockSpec((1, C, tq), lambda qi, b, kv: (b, 0, qi)),     # x (query tile)
                _kv_stream_spec((1, C8, tkv), lambda qi, b, kv: (b, 0, kv)),  # K (bf16)
                _kv_stream_spec((1, C, tkv), lambda qi, b, kv: (b, 0, kv)),   # V (bf16)
                pl.BlockSpec((C8, C), lambda qi, b, kv: (0, 0)),            # Wq (bf16)
                pl.BlockSpec((C8, 1), lambda qi, b, kv: (0, 0)),            # bq
                pl.BlockSpec(memory_space=pltpu.MemorySpace.SMEM),          # gamma scalar
            ],
            out_specs=pl.BlockSpec((1, C, tq), lambda qi, b, kv: (b, 0, qi)),
            scratch_shapes=[
                pltpu.VMEM((C8, tq), jnp.bfloat16),   # q tile (bf16, reused across kv)
                pltpu.VMEM((1, tq), jnp.float32),     # running max
                pltpu.VMEM((1, tq), jnp.float32),     # running sum
                pltpu.VMEM((C, tq), jnp.float32),     # output accumulator
            ],
        ),
        compiler_params=pltpu.CompilerParams(
            dimension_semantics=("parallel", "parallel", "arbitrary"),
            vmem_limit_bytes=vmem_limit),
    )(x_ncl, k_ncl, v_ncl, wq, bq, gamma)

    if L_pad != L:
        out_ncl = out_ncl[:, :, :L]
    return out_ncl.reshape(N, C, H, W)


# ----------------------------- pure-JAX reference -----------------------------

def reference_forward(x_nchw, params):
    """Pure-JAX reference mirroring the PyTorch forward exactly (incl. bk)."""
    N, C, H, W = x_nchw.shape
    L = H * W
    x_flat = x_nchw.reshape(N, C, L)                               # (N, C, L)

    def conv1x1(w, b):  # w: (Cout, Cin), b: (Cout,)
        return jnp.einsum("oc,ncl->nol", w, x_flat) + b[None, :, None]

    q = conv1x1(params["wq"], params["bq"])                        # (N, C8, L)
    k = conv1x1(params["wk"], params["bk"])                        # (N, C8, L)
    v = conv1x1(params["wv"], params["bv"])                        # (N, C, L)

    proj_query = jnp.transpose(q, (0, 2, 1))                       # (N, L, C8)
    energy = jnp.einsum("nlc,ncm->nlm", proj_query, k)             # (N, L, L)
    attention = jax.nn.softmax(energy, axis=-1)
    out = jnp.einsum("ncl,nml->ncm", v, attention)                 # (N, C, L)
    out = out.reshape(N, C, H, W)
    return params["gamma"][0] * out + x_nchw


if __name__ == "__main__":
    # Small shapes consistent with the module (in_dim divisible by 8).
    N, C, H, W = 2, 32, 16, 16        # L = 256 -> 2 query tiles x 2 kv tiles
    C8 = C // 8

    key = jax.random.PRNGKey(0)
    k_x, k_wq, k_bq, k_wk, k_bk, k_wv, k_bv, k_x2 = jax.random.split(key, 8)

    x = jax.random.normal(k_x, (N, C, H, W), dtype=jnp.float32)

    params = {
        "wq": jax.random.normal(k_wq, (C8, C), dtype=jnp.float32) * 0.1,
        "bq": jax.random.normal(k_bq, (C8,), dtype=jnp.float32) * 0.1,
        "wk": jax.random.normal(k_wk, (C8, C), dtype=jnp.float32) * 0.1,
        "bk": jax.random.normal(k_bk, (C8,), dtype=jnp.float32) * 0.1,
        "wv": jax.random.normal(k_wv, (C, C), dtype=jnp.float32) * 0.1,
        "bv": jax.random.normal(k_bv, (C,), dtype=jnp.float32) * 0.1,
        # PyTorch initializes gamma to zero; use a nonzero value so the
        # attention path is actually exercised / checked.
        "gamma": jnp.array([0.5], dtype=jnp.float32),
    }

    # 1) Force 128-wide tiles so the online softmax runs over multiple kv steps
    #    and multiple query tiles.
    out = dam_position_forward(x, params, block_q=128, block_kv=128)
    out = jax.block_until_ready(out)
    ref = jax.block_until_ready(reference_forward(x, params))
    assert out.shape == (N, C, H, W)
    max_err = float(jnp.max(jnp.abs(out - ref)))
    # bf16 MXU inputs + approx reciprocal => relaxed (but still tight) tolerance.
    assert jnp.allclose(out, ref, atol=5e-2, rtol=5e-2), (
        f"mismatch vs reference (max abs err {max_err:.3e})")

    # 2) Spatial extent not divisible by 128 (H=W=10 -> L=100 padded to 128):
    #    exercises the kv-column masking path.
    x2 = jax.random.normal(k_x2, (1, C, 10, 10), dtype=jnp.float32)
    out2 = jax.block_until_ready(dam_position_forward(x2, params))
    ref2 = jax.block_until_ready(reference_forward(x2, params))
    max_err2 = float(jnp.max(jnp.abs(out2 - ref2)))
    assert jnp.allclose(out2, ref2, atol=5e-2, rtol=5e-2), (
        f"padded-path mismatch vs reference (max abs err {max_err2:.3e})")

    print("KERNEL_OK")
</pallas_src>

<mosaic_0001>
module attributes {stable_mosaic.version = 11 : i64} {
  func.func @_project_kv_kernel(%arg0: i32, %arg1: i32, %arg2: memref<1x32x256xf32, #tpu.memory_space<vmem>>, %arg3: memref<4x32xbf16, #tpu.memory_space<vmem>>, %arg4: memref<32x32xbf16, #tpu.memory_space<vmem>>, %arg5: memref<32x1xf32, #tpu.memory_space<vmem>>, %arg6: memref<1x4x256xbf16, #tpu.memory_space<vmem>>, %arg7: memref<1x32x256xbf16, #tpu.memory_space<vmem>>) attributes {dimension_semantics = [#tpu.dimension_semantics<parallel>, #tpu.dimension_semantics<parallel>], iteration_bounds = array<i64: 2, 1>, scalar_prefetch = 0 : i64, scratch_operands = 0 : i64, tpu.core_type = #tpu.core_type<tc>, window_params = [{transform_indices = @transform_0, window_bounds = array<i64: 1, 32, 256>}, {pipeline_mode = #tpu.pipeline_mode<synchronous>, transform_indices = @transform_1, window_bounds = array<i64: 4, 32>}, {pipeline_mode = #tpu.pipeline_mode<synchronous>, transform_indices = @transform_2, window_bounds = array<i64: 32, 32>}, {pipeline_mode = #tpu.pipeline_mode<synchronous>, transform_indices = @transform_3, window_bounds = array<i64: 32, 1>}, {transform_indices = @transform_4, window_bounds = array<i64: 1, 4, 256>}, {transform_indices = @transform_5, window_bounds = array<i64: 1, 32, 256>}]} {
    %c0 = arith.constant 0 : index
    %c0_0 = arith.constant 0 : index
    %c0_1 = arith.constant 0 : index
    %0 = vector.load %arg2[%c0, %c0_0, %c0_1] : memref<1x32x256xf32, #tpu.memory_space<vmem>>, vector<1x32x256xf32>
    %1 = vector.shape_cast %0 : vector<1x32x256xf32> to vector<32x256xf32>
    %2 = arith.truncf %1 : vector<32x256xf32> to vector<32x256xbf16>
    %c0_2 = arith.constant 0 : index
    %c0_3 = arith.constant 0 : index
    %3 = vector.load %arg3[%c0_2, %c0_3] : memref<4x32xbf16, #tpu.memory_space<vmem>>, vector<4x32xbf16>
    %cst = arith.constant dense<0.000000e+00> : vector<4x256xf32>
    %4 = tpu.matmul %3, %2, %cst {dimension_numbers = #tpu.dot_dimension_numbers<[1], [0], [0], [1], [0, 0, 1, 1], [], []>} : vector<4x32xbf16>, vector<32x256xbf16>, vector<4x256xf32> -> vector<4x256xf32>
    %c0_4 = arith.constant 0 : index
    %c0_5 = arith.constant 0 : index
    %5 = vector.load %arg4[%c0_4, %c0_5] : memref<32x32xbf16, #tpu.memory_space<vmem>>, vector<32x32xbf16>
    %cst_6 = arith.constant dense<0.000000e+00> : vector<32x256xf32>
    %6 = tpu.matmul %5, %2, %cst_6 {dimension_numbers = #tpu.dot_dimension_numbers<[1], [0], [0], [1], [0, 0, 1, 1], [], []>} : vector<32x32xbf16>, vector<32x256xbf16>, vector<32x256xf32> -> vector<32x256xf32>
    %c0_7 = arith.constant 0 : index
    %c0_8 = arith.constant 0 : index
    %7 = vector.load %arg5[%c0_7, %c0_8] : memref<32x1xf32, #tpu.memory_space<vmem>>, vector<32x1xf32>
    %8 = vector.broadcast %7 : vector<32x1xf32> to vector<32x256xf32>
    %9 = arith.addf %6, %8 : vector<32x256xf32>
    %10 = arith.truncf %4 : vector<4x256xf32> to vector<4x256xbf16>
    %c0_9 = arith.constant 0 : index
    %c0_10 = arith.constant 0 : index
    %c0_11 = arith.constant 0 : index
    %11 = vector.load %arg6[%c0_9, %c0_10, %c0_11] : memref<1x4x256xbf16, #tpu.memory_space<vmem>>, vector<1x4x256xbf16>
    %12 = vector.shape_cast %11 : vector<1x4x256xbf16> to vector<4x256xbf16>
    %13 = vector.shape_cast %10 : vector<4x256xbf16> to vector<1x4x256xbf16>
    tpu.vector_store %arg6[%c0_9, %c0_10, %c0_11], %13 {strides = array<i32>} : memref<1x4x256xbf16, #tpu.memory_space<vmem>>, vector<1x4x256xbf16>,
    %14 = arith.truncf %9 : vector<32x256xf32> to vector<32x256xbf16>
    %c0_12 = arith.constant 0 : index
    %c0_13 = arith.constant 0 : index
    %c0_14 = arith.constant 0 : index
    %15 = vector.load %arg7[%c0_12, %c0_13, %c0_14] : memref<1x32x256xbf16, #tpu.memory_space<vmem>>, vector<1x32x256xbf16>
    %16 = vector.shape_cast %15 : vector<1x32x256xbf16> to vector<32x256xbf16>
    %17 = vector.shape_cast %14 : vector<32x256xbf16> to vector<1x32x256xbf16>
    tpu.vector_store %arg7[%c0_12, %c0_13, %c0_14], %17 {strides = array<i32>} : memref<1x32x256xbf16, #tpu.memory_space<vmem>>, vector<1x32x256xbf16>,
    return
  }
  func.func @transform_0(%arg0: i32, %arg1: i32) -> (i32, i32, i32) {
    %c0_i32 = arith.constant 0 : i32
    %c0_i32_0 = arith.constant 0 : i32
    return %arg0, %c0_i32, %arg1 : i32, i32, i32
  }
  func.func @transform_1(%arg0: i32, %arg1: i32) -> (i32, i32) {
    %c0_i32 = arith.constant 0 : i32
    %c0_i32_0 = arith.constant 0 : i32
    %c0_i32_1 = arith.constant 0 : i32
    return %c0_i32, %c0_i32_0 : i32, i32
  }
  func.func @transform_2(%arg0: i32, %arg1: i32) -> (i32, i32) {
    %c0_i32 = arith.constant 0 : i32
    %c0_i32_0 = arith.constant 0 : i32
    %c0_i32_1 = arith.constant 0 : i32
    return %c0_i32, %c0_i32_0 : i32, i32
  }
  func.func @transform_3(%arg0: i32, %arg1: i32) -> (i32, i32) {
    %c0_i32 = arith.constant 0 : i32
    %c0_i32_0 = arith.constant 0 : i32
    %c0_i32_1 = arith.constant 0 : i32
    return %c0_i32, %c0_i32_0 : i32, i32
  }
  func.func @transform_4(%arg0: i32, %arg1: i32) -> (i32, i32, i32) {
    %c0_i32 = arith.constant 0 : i32
    %c0_i32_0 = arith.constant 0 : i32
    return %arg0, %c0_i32, %arg1 : i32, i32, i32
  }
  func.func @transform_5(%arg0: i32, %arg1: i32) -> (i32, i32, i32) {
    %c0_i32 = arith.constant 0 : i32
    %c0_i32_0 = arith.constant 0 : i32
    return %arg0, %c0_i32, %arg1 : i32, i32, i32
  }
}

</mosaic_0001>

<llo_original>
// kernel: tpu_custom_call.1
$region0: #{tpu_custom_call.1}
  #allocation0 [shape = 'u32[]', space=smem, size = 0x4, offset = 0x4, fixed_abs, tag = 'smem constant byte address 0x4 - core index']
  #allocation1 [shape = 'u32[72,128]{1,0:T(1,128)}', space=vmem, size = 0x9000, scoped, tag = 'internal scratch']
  %s0 = inlined_call_operand.hbm [shape: f32[2,32,256], index: 0, kind: input, shape index: {}]
  %s1 = inlined_call_operand.vmem [shape: bf16[4,32], index: 1, kind: input, shape index: {}]
  %s2 = inlined_call_operand.vmem [shape: bf16[32,32], index: 2, kind: input, shape index: {}]
  %s3 = inlined_call_operand.vmem [shape: f32[32,1], index: 3, kind: input, shape index: {}]
  %s4 = inlined_call_operand.hbm [shape: bf16[2,4,256], index: 4, kind: output, shape index: {0}]
  %s5 = inlined_call_operand.hbm [shape: bf16[2,32,256], index: 5, kind: output, shape index: {1}]
  %6 = xla_tuple %s4, %s5
  %s7 = sld [smem:[#allocation0]]
  $region61: #{tpu_custom_call.1} parent=0
    _
  %s9 = ssub.s32 1, %s7
  %s10 = scalar_select 0, %s9, %s7
  $region1: #{tpu_custom_call.1} parent=0
    #allocation2 [shape = 'u8[65536]{0}', space=vmem, size = 0x10000, scoped, tag = 'input window, operand 0']
    #allocation3 [shape = 's32[2]{0}', space=sflag, size = 0x8, scoped, tag = 'scoped memory for tpu_custom_call.1']
    #allocation4 [shape = 's32[2]{0}', space=sflag, size = 0x8, scoped, tag = 'scoped memory for tpu_custom_call.1']
    #allocation5 [shape = 'u8[4096]{0}', space=vmem, size = 0x1000, scoped, tag = 'output window, operand 0']
    #allocation6 [shape = 'u8[32768]{0}', space=vmem, size = 0x8000, scoped, tag = 'output window, operand 1']
    #allocation7 [shape = 's32[2]{0}', space=sflag, size = 0x8, scoped, tag = 'scoped memory for tpu_custom_call.1']
    %11 = vsyncpa [#allocation3], 0
    %s12 = scalar_lea.sflag [#allocation3], 1
    %13 = vsyncpa %s12, 0
    %14 = vsyncpa [#allocation4], 0
    %s15 = scalar_lea.sflag [#allocation4], 1
    %16 = vsyncpa %s15, 0
    %17 = vsyncpa [#allocation7], 0
    %s18 = scalar_lea.sflag [#allocation7], 1
    %19 = vsyncpa %s18, 0
    loop: start=0, step=1, limit=4
    $region2: #{tpu_custom_call.1} parent=1 // loop_pre_header
      _
    $region3: #{tpu_custom_call.1} parent=1 // loop_header
      %s21 = sphi 0, %s25
      %p22 = scmp.ge.s32.totalorder %s21, 4
      %s28 = sphi 0, %s40
      %s29 = sphi 0, %s36
      %s30 = sphi 0, %s28
      %s31 = sphi 0, %s29
      %s32 = sphi 0, %s30
      %s33 = sphi 0, %s31
      %s45 = sphi 0, %s47
      %s48 = sphi 0, %s45
      %s49 = sphi 0, %s48
      %s65 = sphi 0, %s49
      %s69 = sphi 0, %s69
      %s71 = sphi 0, %s69
      %s72 = sphi 0, %s71
      %s86 = sphi 0, %s72
      %s90 = sphi 0, %s90
      %s92 = sphi 0, %s90
      %s93 = sphi 0, %s92
      %s107 = sphi 0, %s93
      %s111 = sphi 0, %s111
      %s113 = sphi 0, %s111
      %s114 = sphi 0, %s113
      %s128 = sphi 0, %s114
      %s136 = sphi 0, %s138
      %s139 = sphi 0, %s136
      %s140 = sphi 0, %s139
      %s156 = sphi 0, %s140
      %s164 = sphi 0, %s166
      %s167 = sphi 0, %s164
      %s168 = sphi 0, %s167
      %s184 = sphi 0, %s168
    $region4: #{tpu_custom_call.1} parent=1 // loop_header_branch
      %24 = sbr.rel (%p22) target = $region8
    $region5: #{tpu_custom_call.1} parent=1 // loop_body
      %s26 = ssub.s32 %s21, 1
      %s27 = ssub.s32 %s21, 2
      %s34 = sadd.s32 1, %s29
      %p35 = scmp.ge.s32.totalorder %s34, 1
      %s36 = scalar_select %p35, 0, %s34
      %s37 = sadd.s32 1, %s28
      %s38 = scalar_select %p35, %s37, %s28
      %p39 = scmp.ge.s32.totalorder %s38, 2
      %s40 = scalar_select %p39, 0, %s38
      %s41 = ssub.s32 %s28, %s40
      %s42 = ssub.s32 %s29, %s36
      %s43 = sor.u32 %s41, %s42
      %p44 = scmp.eq.s32.totalorder %s43, 0
      %s46 = sadd.s32 %s45, 1
      %s47 = scalar_select %p44, %s45, %s46
      %p50 = pneg %p44
      %p51 = scmp.eq.s32.totalorder %s21, 1
      %p52 = por %p50, %p51
      %p53 = scmp.ne.s32.totalorder %s45, %s48
      %p54 = scmp.eq.s32.totalorder %s21, 0
      %p55 = por %p53, %p54
      %p56 = scmp.ne.s32.totalorder %s45, %s48
      %p57 = scmp.eq.s32.totalorder %s26, 1
      %p58 = por %p56, %p57
      %p59 = scmp.ne.s32.totalorder %s48, %s49
      %p60 = scmp.eq.s32.totalorder %s26, 0
      %p61 = por %p59, %p60
      %p62 = scmp.ne.s32.totalorder %s48, %s49
      %p63 = scmp.eq.s32.totalorder %s27, 1
      %p64 = por %p62, %p63
      %p66 = scmp.ne.s32.totalorder %s49, %s65
      %p67 = scmp.eq.s32.totalorder %s27, 0
      %p68 = por %p66, %p67
      %s70 = sadd.s32 %s69, 1
      %p73 = scmp.eq.s32.totalorder %s21, 1
      %p74 = scmp.ne.s32.totalorder %s69, %s71
      %p75 = scmp.eq.s32.totalorder %s21, 0
      %p76 = por %p74, %p75
      %p77 = scmp.ne.s32.totalorder %s69, %s71
      %p78 = scmp.eq.s32.totalorder %s26, 1
      %p79 = por %p77, %p78
      %p80 = scmp.ne.s32.totalorder %s71, %s72
      %p81 = scmp.eq.s32.totalorder %s26, 0
      %p82 = por %p80, %p81
      %p83 = scmp.ne.s32.totalorder %s71, %s72
      %p84 = scmp.eq.s32.totalorder %s27, 1
      %p85 = por %p83, %p84
      %p87 = scmp.ne.s32.totalorder %s72, %s86
      %p88 = scmp.eq.s32.totalorder %s27, 0
      %p89 = por %p87, %p88
      %s91 = sadd.s32 %s90, 1
      %p94 = scmp.eq.s32.totalorder %s21, 1
      %p95 = scmp.ne.s32.totalorder %s90, %s92
      %p96 = scmp.eq.s32.totalorder %s21, 0
      %p97 = por %p95, %p96
      %p98 = scmp.ne.s32.totalorder %s90, %s92
      %p99 = scmp.eq.s32.totalorder %s26, 1
      %p100 = por %p98, %p99
      %p101 = scmp.ne.s32.totalorder %s92, %s93
      %p102 = scmp.eq.s32.totalorder %s26, 0
      %p103 = por %p101, %p102
      %p104 = scmp.ne.s32.totalorder %s92, %s93
      %p105 = scmp.eq.s32.totalorder %s27, 1
      %p106 = por %p104, %p105
      %p108 = scmp.ne.s32.totalorder %s93, %s107
      %p109 = scmp.eq.s32.totalorder %s27, 0
      %p110 = por %p108, %p109
      %s112 = sadd.s32 %s111, 1
      %p115 = scmp.eq.s32.totalorder %s21, 1
      %p116 = scmp.ne.s32.totalorder %s111, %s113
      %p117 = scmp.eq.s32.totalorder %s21, 0
      %p118 = por %p116, %p117
      %p119 = scmp.ne.s32.totalorder %s111, %s113
      %p120 = scmp.eq.s32.totalorder %s26, 1
      %p121 = por %p119, %p120
      %p122 = scmp.ne.s32.totalorder %s113, %s114
      %p123 = scmp.eq.s32.totalorder %s26, 0
      %p124 = por %p122, %p123
      %p125 = scmp.ne.s32.totalorder %s113, %s114
      %p126 = scmp.eq.s32.totalorder %s27, 1
      %p127 = por %p125, %p126
      %p129 = scmp.ne.s32.totalorder %s114, %s128
      %p130 = scmp.eq.s32.totalorder %s27, 0
      %p131 = por %p129, %p130
      %s132 = ssub.s32 %s28, %s40
      %s133 = ssub.s32 %s29, %s36
      %s134 = sor.u32 %s132, %s133
      %p135 = scmp.eq.s32.totalorder %s134, 0
      %s137 = sadd.s32 %s136, 1
      %s138 = scalar_select %p135, %s136, %s137
      %p141 = pneg %p135
      %p142 = scmp.eq.s32.totalorder %s21, 1
      %p143 = por %p141, %p142
      %p144 = scmp.ne.s32.totalorder %s136, %s139
      %p145 = scmp.eq.s32.totalorder %s21, 0
      %p146 = por %p144, %p145
      %p147 = scmp.ne.s32.totalorder %s136, %s139
      %p148 = scmp.eq.s32.totalorder %s26, 1
      %p149 = por %p147, %p148
      %p150 = scmp.ne.s32.totalorder %s139, %s140
      %p151 = scmp.eq.s32.totalorder %s26, 0
      %p152 = por %p150, %p151
      %p153 = scmp.ne.s32.totalorder %s139, %s140
      %p154 = scmp.eq.s32.totalorder %s27, 1
      %p155 = por %p153, %p154
      %p157 = scmp.ne.s32.totalorder %s140, %s156
      %p158 = scmp.eq.s32.totalorder %s27, 0
      %p159 = por %p157, %p158
      %s160 = ssub.s32 %s28, %s40
      %s161 = ssub.s32 %s29, %s36
      %s162 = sor.u32 %s160, %s161
      %p163 = scmp.eq.s32.totalorder %s162, 0
      %s165 = sadd.s32 %s164, 1
      %s166 = scalar_select %p163, %s164, %s165
      %p169 = pneg %p163
      %p170 = scmp.eq.s32.totalorder %s21, 1
      %p171 = por %p169, %p170
      %p172 = scmp.ne.s32.totalorder %s164, %s167
      %p173 = scmp.eq.s32.totalorder %s21, 0
      %p174 = por %p172, %p173
      %p175 = scmp.ne.s32.totalorder %s164, %s167
      %p176 = scmp.eq.s32.totalorder %s26, 1
      %p177 = por %p175, %p176
      %p178 = scmp.ne.s32.totalorder %s167, %s168
      %p179 = scmp.eq.s32.totalorder %s26, 0
      %p180 = por %p178, %p179
      %p181 = scmp.ne.s32.totalorder %s167, %s168
      %p182 = scmp.eq.s32.totalorder %s27, 1
      %p183 = por %p181, %p182
      %p185 = scmp.ne.s32.totalorder %s168, %s184
      %p186 = scmp.eq.s32.totalorder %s27, 0
      %p187 = por %p185, %p186
      %p188 = scmp.le.s32.totalorder 1, %s21
      %p189 = scmp.lt.s32.totalorder %s21, 3
      %p190 = pnand %p188, %p189
      %p191 = pneg %p190
      // Predicated region
      $region9: #{tpu_custom_call.1} parent=5 // pred_check
        _
      $region10: #{tpu_custom_call.1} parent=5 // pred_check_branch
        %193 = sbr.rel (%p190) target = $region12
      $region11: #{tpu_custom_call.1} parent=5 // pred_region
        %s194 = ssub.s32 %s21, 1
        // Predicated region
        $region13: #{tpu_custom_call.1} parent=11 // pred_check
          %p195 = pneg %p82
        $region14: #{tpu_custom_call.1} parent=11 // pred_check_branch
          %197 = sbr.rel (%p195) target = $region16
        $region15: #{tpu_custom_call.1} parent=11 // pred_region
          _
        $region16: #{tpu_custom_call.1} parent=11 // pred_fallthru
          _
        // Predicated region
        $region17: #{tpu_custom_call.1} parent=11 // pred_check
          %p198 = pneg %p103
        $region18: #{tpu_custom_call.1} parent=11 // pred_check_branch
          %200 = sbr.rel (%p198) target = $region20
        $region19: #{tpu_custom_call.1} parent=11 // pred_region
          _
        $region20: #{tpu_custom_call.1} parent=11 // pred_fallthru
          _
        // Predicated region
        $region21: #{tpu_custom_call.1} parent=11 // pred_check
          %p201 = pneg %p124
        $region22: #{tpu_custom_call.1} parent=11 // pred_check_branch
          %203 = sbr.rel (%p201) target = $region24
        $region23: #{tpu_custom_call.1} parent=11 // pred_region
          _
        $region24: #{tpu_custom_call.1} parent=11 // pred_fallthru
          _
      $region12: #{tpu_custom_call.1} parent=5 // pred_fallthru
        _
      %p204 = scmp.lt.s32.totalorder %s21, 2
      // Predicated region
      $region25: #{tpu_custom_call.1} parent=5 // pred_check
        %p205 = pneg %p204
      $region26: #{tpu_custom_call.1} parent=5 // pred_check_branch
        %207 = sbr.rel (%p205) target = $region28
      $region27: #{tpu_custom_call.1} parent=5 // pred_region
        // Predicated region
        $region29: #{tpu_custom_call.1} parent=27 // pred_check
          %p208 = pneg %p55
        $region30: #{tpu_custom_call.1} parent=27 // pred_check_branch
          %210 = sbr.rel (%p208) target = $region32
        $region31: #{tpu_custom_call.1} parent=27 // pred_region
          %s211 = sand.u32 %s45, 1
          %s212 = scalar_lea.sflag [#allocation3], %s211
          %s213 = sand.u32 %s45, 1
          %s214 = smul.addr %s213, 64
          %s215 = scalar_lea.vmem [#allocation2], %s214
          %s216 = smul.u32 2, %s29
          %218 = vsyncadd %s212, 0
          %s219 = smul.addr %s28, 8
          %s220 = sadd.s32 %s216, %s219
          %s221 = smul.addr %s220, 8
          %s222 = scalar_lea.hbm %s0, %s221
          %s223 = sshll.u32 %s222, 4
          %s224 = int_to_ptr.hbm [resolvable:$true] %s223
          %s225 = sshll.u32 %s215, 4
          %s226 = int_to_ptr.vmem [resolvable:$true] %s225
          %231 = dma.hbm_to_vmem [thread:$0]  %s224, 1024, %s226, %s212, 256, 256, 16
        $region32: #{tpu_custom_call.1} parent=27 // pred_fallthru
          _
      $region28: #{tpu_custom_call.1} parent=5 // pred_fallthru
        _
      %p232 = scmp.le.s32.totalorder 1, %s21
      %p233 = scmp.lt.s32.totalorder %s21, 3
      %p234 = pnand %p232, %p233
      %p235 = pneg %p234
      // Predicated region
      $region33: #{tpu_custom_call.1} parent=5 // pred_check
        _
      $region34: #{tpu_custom_call.1} parent=5 // pred_check_branch
        %237 = sbr.rel (%p234) target = $region36
      $region35: #{tpu_custom_call.1} parent=5 // pred_region
        %s238 = ssub.s32 %s21, 1
        %s239 = sand.u32 %s48, 1
        %s240 = scalar_lea.sflag [#allocation3], %s239
        %s241 = sand.u32 %s48, 1
        %s242 = smul.addr %s241, 64
        %s243 = scalar_lea.vmem [#allocation2], %s242
        // Predicated region
        $region37: #{tpu_custom_call.1} parent=35 // pred_check
          %p244 = pneg %p61
        $region38: #{tpu_custom_call.1} parent=35 // pred_check_branch
          %246 = sbr.rel (%p244) target = $region40
        $region39: #{tpu_custom_call.1} parent=35 // pred_region
          %248 = dma.done %s240, 1024
        $region40: #{tpu_custom_call.1} parent=35 // pred_fallthru
          _
        %s249 = sand.u32 %s48, 1
        %s250 = scalar_lea.sflag [#allocation3], %s249
        %s251 = sand.u32 %s48, 1
        %s252 = smul.addr %s251, 64
        %s253 = scalar_lea.vmem [#allocation2], %s252
        %p254 = pneg %p61
        %p255 = pneg %p58
        %p256 = pneg %p82
        %p257 = pneg %p79
        %p258 = pneg %p103
        %p259 = pneg %p100
        %p260 = pneg %p124
        %p261 = pneg %p121
        %p262 = pneg %p152
        %p263 = pneg %p149
        %s264 = sand.u32 %s139, 1
        %s265 = scalar_lea.sflag [#allocation4], %s264
        %s266 = sand.u32 %s139, 1
        %s267 = smul.addr %s266, 4
        %s268 = scalar_lea.vmem [#allocation5], %s267
        %p269 = pneg %p180
        %p270 = pneg %p177
        %s271 = sand.u32 %s167, 1
        %s272 = scalar_lea.sflag [#allocation7], %s271
        %s273 = sand.u32 %s167, 1
        %s274 = smul.addr %s273, 32
        %s275 = scalar_lea.vmem [#allocation6], %s274
        %s276 = smul.u32 2, %s31
        %s277 = smul.u32 2, %s31
        %s278 = smul.u32 2, %s31
        %v280 = vld [vmem:[%s243] sm:$0xff]
        %v281 = vld [vmem:[%s243 + $0x8] sm:$0xff]
        %v282 = vld [vmem:[%s243 + $0x10] sm:$0xff]
        %v283 = vld [vmem:[%s243 + $0x18] sm:$0xff]
        %v284 = vld [vmem:[%s243 + $0x20] sm:$0xff]
        %v285 = vld [vmem:[%s243 + $0x28] sm:$0xff]
        %v286 = vld [vmem:[%s243 + $0x30] sm:$0xff]
        %v287 = vld [vmem:[%s243 + $0x38] sm:$0xff]
        %v288 = vpack.c.bf16 %v282, %v280
        %v289 = vpack.c.bf16 %v283, %v281
        %v290 = vpack.c.bf16 %v286, %v284
        %v291 = vpack.c.bf16 %v287, %v285
        %v292 = vld [vmem:[%s1] sm:$0x3]
        %vm293 = vcmask 261120
        %v295 = vsel %vm293, %v292, 0
        %297 = vmatpush.bf16.msra.mxu0 0
        %298 = vmatpush.bf16.msra.mxu0 0
        %299 = vmatpush.bf16.msra.mxu0 0
        %300 = vmatpush.bf16.msra.mxu0 0
        %301 = vmatpush.bf16.msra.mxu0 0
        %302 = vmatpush.bf16.msra.mxu0 0
        %303 = vmatpush.bf16.msra.mxu0 %v290
        %304 = vmatpush.bf16.msra.mxu0 %v288
        %305 = vmatmul.bf16.gmra.mxu0 %v295
        %v306 = vpop.f32.mrf.mxu0
        %v307 = vadd.f32 0.0, %v306
        %v308 = vpop.f32.mrf.mxu0
        %309 = vdwg.mxu0
        %310 = vmatpush.bf16.msra.mxu0 0
        %311 = vmatpush.bf16.msra.mxu0 0
        %312 = vmatpush.bf16.msra.mxu0 0
        %313 = vmatpush.bf16.msra.mxu0 0
        %314 = vmatpush.bf16.msra.mxu0 0
        %315 = vmatpush.bf16.msra.mxu0 0
        %316 = vmatpush.bf16.msra.mxu0 %v291
        %317 = vmatpush.bf16.msra.mxu0 %v289
        %318 = vmatmul.bf16.gmra.mxu0 %v295
        %v319 = vpop.f32.mrf.mxu0
        %v320 = vadd.f32 0.0, %v319
        %v321 = vpop.f32.mrf.mxu0
        %322 = vdwg.mxu0
        %v323 = vld [vmem:[%s2] sm:$0xf]
        %v324 = vld [vmem:[%s2 + $0x4] sm:$0xf]
        %v325 = vld [vmem:[%s2 + $0x8] sm:$0xf]
        %v326 = vld [vmem:[%s2 + $0xc] sm:$0xf]
        %v327 = vld [vmem:[%s3] sm:$0xff]
        %v328 = vld [vmem:[%s3 + $0x8] sm:$0xff]
        %v329 = vld [vmem:[%s3 + $0x10] sm:$0xff]
        %v330 = vld [vmem:[%s3 + $0x18] sm:$0xff]
        %332 = vset.pattern.permute.xlu0 0
        %333 = vperm.xlu0 %332, %v327
        %v334 = vpop.permute.xlu0 %333
        %337 = vset.pattern.permute.xlu0 0
        %338 = vperm.xlu0 %337, %v328
        %v339 = vpop.permute.xlu0 %338
        %342 = vset.pattern.permute.xlu0 0
        %343 = vperm.xlu0 %342, %v329
        %v344 = vpop.permute.xlu0 %343
        %347 = vset.pattern.permute.xlu0 0
        %348 = vperm.xlu0 %347, %v330
        %v349 = vpop.permute.xlu0 %348
        %v355 = vunpack.c.l.b16 %v323
        %v356 = vunpack.c.l.b16 %v324
        %v357 = vunpack.c.l.b16 %v325
        %v358 = vunpack.c.l.b16 %v326
        %v359 = vpack.c.b16 %v356, %v355
        %v360 = vpack.c.b16 %v358, %v357
        %v362 = vsel %vm293, %v359, 0
        %v365 = vsel %vm293, %v360, 0
        %367 = vmatpush.bf16.msra.mxu0 0
        %368 = vmatpush.bf16.msra.mxu0 0
        %369 = vmatpush.bf16.msra.mxu0 0
        %370 = vmatpush.bf16.msra.mxu0 0
        %371 = vmatpush.bf16.msra.mxu0 0
        %372 = vmatpush.bf16.msra.mxu0 0
        %373 = vmatpush.bf16.msra.mxu0 %v290
        %374 = vmatpush.bf16.msra.mxu0 %v288
        %375 = vmatmul.bf16.gmra.mxu0 %v362
        %v376 = vpop.f32.mrf.mxu0
        %v377 = vadd.f32 %v334, %v376
        %v378 = vpop.f32.mrf.mxu0
        %v379 = vadd.f32 %v339, %v378
        %380 = vmatmul.bf16.gmra.mxu0 %v365
        %v381 = vpop.f32.mrf.mxu0
        %v382 = vadd.f32 %v344, %v381
        %v383 = vpop.f32.mrf.mxu0
        %v384 = vadd.f32 %v349, %v383
        %385 = vdwg.mxu0
        %386 = vmatpush.bf16.msra.mxu0 0
        %387 = vmatpush.bf16.msra.mxu0 0
        %388 = vmatpush.bf16.msra.mxu0 0
        %389 = vmatpush.bf16.msra.mxu0 0
        %390 = vmatpush.bf16.msra.mxu0 0
        %391 = vmatpush.bf16.msra.mxu0 0
        %392 = vmatpush.bf16.msra.mxu0 %v291
        %393 = vmatpush.bf16.msra.mxu0 %v289
        %394 = vmatmul.bf16.gmra.mxu0 %v362
        %v395 = vpop.f32.mrf.mxu0
        %v396 = vadd.f32 %v334, %v395
        %v397 = vpop.f32.mrf.mxu0
        %v398 = vadd.f32 %v339, %v397
        %399 = vmatmul.bf16.gmra.mxu0 %v365
        %v400 = vpop.f32.mrf.mxu0
        %v401 = vadd.f32 %v344, %v400
        %v402 = vpop.f32.mrf.mxu0
        %v403 = vadd.f32 %v349, %v402
        %404 = vdwg.mxu0
        %v405 = vpack.c.bf16 %v320, %v307
        %v407 = vrot.slane %v405, 2
        %vm408 = vcmask 1041408
        %v411 = vsel %vm408, %v405, %v407
        %413 = vst [vmem:[%s268] sm:$0xf] %v411
        %v414 = vpack.c.bf16 %v396, %v377
        %v415 = vpack.c.bf16 %v398, %v379
        %v416 = vpack.c.bf16 %v401, %v382
        %v417 = vpack.c.bf16 %v403, %v384
        %418 = vst [vmem:[%s275] sm:$0xff] %v414
        %419 = vst [vmem:[%s275 + $0x8] sm:$0xff] %v415
        %420 = vst [vmem:[%s275 + $0x10] sm:$0xff] %v416
        %421 = vst [vmem:[%s275 + $0x18] sm:$0xff] %v417
        %s422 = sand.u32 %s139, 1
        %s423 = scalar_lea.sflag [#allocation4], %s422
        %s424 = sand.u32 %s139, 1
        %s425 = smul.addr %s424, 4
        %s426 = scalar_lea.vmem [#allocation5], %s425
        %s427 = sand.u32 %s167, 1
        %s428 = scalar_lea.sflag [#allocation7], %s427
        %s429 = sand.u32 %s167, 1
        %s430 = smul.addr %s429, 32
        %s431 = scalar_lea.vmem [#allocation6], %s430
        // Predicated region
        $region41: #{tpu_custom_call.1} parent=35 // pred_check
          %p432 = pneg %p149
        $region42: #{tpu_custom_call.1} parent=35 // pred_check_branch
          %434 = sbr.rel (%p432) target = $region44
        $region43: #{tpu_custom_call.1} parent=35 // pred_region
          %s435 = smul.u32 2, %s31
          %437 = vsyncadd %s423, 0
          %s438 = smul.addr %s30, 2
          %s439 = sadd.s32 %s435, %s438
          %s440 = smul.addr %s439, 2
          %s441 = scalar_lea.hbm %s4, %s440
          %s443 = sshll.u32 %s426, 4
          %s444 = int_to_ptr.vmem [resolvable:$true] %s443
          %s445 = sshll.u32 %s441, 4
          %s446 = int_to_ptr.hbm [resolvable:$true] %s445
          %448 = dma.vmem_to_hbm [thread:$0]  %s444, 64, %s446, %s423
        $region44: #{tpu_custom_call.1} parent=35 // pred_fallthru
          _
        // Predicated region
        $region45: #{tpu_custom_call.1} parent=35 // pred_check
          %p449 = pneg %p177
        $region46: #{tpu_custom_call.1} parent=35 // pred_check_branch
          %451 = sbr.rel (%p449) target = $region48
        $region47: #{tpu_custom_call.1} parent=35 // pred_region
          %s452 = smul.u32 2, %s31
          %454 = vsyncadd %s428, 0
          %s455 = smul.addr %s30, 8
          %s456 = sadd.s32 %s452, %s455
          %s457 = smul.addr %s456, 4
          %s458 = scalar_lea.hbm %s5, %s457
          %s459 = sshll.u32 %s431, 4
          %s460 = int_to_ptr.vmem [resolvable:$true] %s459
          %s461 = sshll.u32 %s458, 4
          %s462 = int_to_ptr.hbm [resolvable:$true] %s461
          %467 = dma.vmem_to_hbm [thread:$0]  %s460, 512, %s462, %s428, 128, 128, 8
        $region48: #{tpu_custom_call.1} parent=35 // pred_fallthru
          _
      $region36: #{tpu_custom_call.1} parent=5 // pred_fallthru
        _
      %p468 = scmp.le.s32.totalorder 2, %s21
      // Predicated region
      $region49: #{tpu_custom_call.1} parent=5 // pred_check
        %p469 = pneg %p468
      $region50: #{tpu_custom_call.1} parent=5 // pred_check_branch
        %471 = sbr.rel (%p469) target = $region52
      $region51: #{tpu_custom_call.1} parent=5 // pred_region
        %s472 = ssub.s32 %s21, 2
        // Predicated region
        $region53: #{tpu_custom_call.1} parent=51 // pred_check
          %p473 = pneg %p155
        $region54: #{tpu_custom_call.1} parent=51 // pred_check_branch
          %475 = sbr.rel (%p473) target = $region56
        $region55: #{tpu_custom_call.1} parent=51 // pred_region
          %s476 = sand.u32 %s140, 1
          %s477 = scalar_lea.sflag [#allocation4], %s476
          %s478 = sand.u32 %s140, 1
          %s479 = smul.addr %s478, 4
          %s480 = scalar_lea.vmem [#allocation5], %s479
          %482 = dma.done %s477, 64
        $region56: #{tpu_custom_call.1} parent=51 // pred_fallthru
          _
        // Predicated region
        $region57: #{tpu_custom_call.1} parent=51 // pred_check
          %p483 = pneg %p183
        $region58: #{tpu_custom_call.1} parent=51 // pred_check_branch
          %485 = sbr.rel (%p483) target = $region60
        $region59: #{tpu_custom_call.1} parent=51 // pred_region
          %s486 = sand.u32 %s168, 1
          %s487 = scalar_lea.sflag [#allocation7], %s486
          %s488 = sand.u32 %s168, 1
          %s489 = smul.addr %s488, 32
          %s490 = scalar_lea.vmem [#allocation6], %s489
          %492 = dma.done %s487, 512
        $region60: #{tpu_custom_call.1} parent=51 // pred_fallthru
          _
      $region52: #{tpu_custom_call.1} parent=5 // pred_fallthru
        _
    $region6: #{tpu_custom_call.1} parent=1 // loop_footer
      %s25 = sadd.s32 1, %s21
    $region7: #{tpu_custom_call.1} parent=1 // loop_footer_branch
      %20 = sbr.rel target = $region3
    $region8: #{tpu_custom_call.1} parent=1 // loop_exit
      _
    %493 = vsyncpa [#allocation3], 1
    %s494 = scalar_lea.sflag [#allocation3], 1
    %495 = vsyncpa %s494, 1
    %496 = vsyncpa [#allocation4], 1
    %s497 = scalar_lea.sflag [#allocation4], 1
    %498 = vsyncpa %s497, 1
    %499 = vsyncpa [#allocation7], 1
    %s500 = scalar_lea.sflag [#allocation7], 1
    %501 = vsyncpa %s500, 1

</llo_original>
